<compile_context>
chip_gen: v5e
topology: v5e:2x2
jax: 0.10.0
libtpu: 0.0.40
codegen_flags: <defaults>
</compile_context>

<pallas_src>
import functools

import jax
import jax.numpy as jnp
from jax.experimental import pallas as pl
from jax.experimental.pallas import tpu as pltpu

LANE = 128  # TPU vreg lane width


def _round_up(x, m):
    return ((x + m - 1) // m) * m


def qnetwork_kernel(x_ref,
                    w1_ref, b1_ref,
                    w2_ref, b2_ref,
                    w3_ref, b3_ref,
                    w4_ref, b4_ref,
                    o_ref):
    """relu(relu(relu(relu(x@W1+b1)@W2+b2)@W3+b3)@W4+b4) on one batch tile.

    Weights arrive already cast to the compute dtype (bf16 by default);
    dots accumulate in f32 and the bias/ReLU epilogue stays in f32.
    """
    cdt = w1_ref.dtype  # compute dtype for MXU inputs (bf16 or f32)

    h = x_ref[...].astype(cdt)
    h = jnp.dot(h, w1_ref[...], preferred_element_type=jnp.float32) + b1_ref[...]
    h = jnp.maximum(h, 0.0)

    h = jnp.dot(h.astype(cdt), w2_ref[...], preferred_element_type=jnp.float32) + b2_ref[...]
    h = jnp.maximum(h, 0.0)

    h = jnp.dot(h.astype(cdt), w3_ref[...], preferred_element_type=jnp.float32) + b3_ref[...]
    h = jnp.maximum(h, 0.0)

    h = jnp.dot(h.astype(cdt), w4_ref[...], preferred_element_type=jnp.float32) + b4_ref[...]
    h = jnp.maximum(h, 0.0)  # PyTorch spec applies ReLU after fc4 as well.

    o_ref[...] = h.astype(o_ref.dtype)


@functools.partial(jax.jit, static_argnames=("compute_dtype", "tb_max"))
def qnetwork_forward(state, params, *, compute_dtype=jnp.bfloat16, tb_max=1024):
    """state: (B, observation_dim) f32.  params: dict of (in,out) W and (1,out) b (f32)."""
    B, obs_dim = state.shape
    action_dim = params["w4"].shape[1]

    # --- Lane-pad every output feature dim to a multiple of 128 (zeros). -----
    P1 = _round_up(params["w1"].shape[1], LANE)
    P2 = _round_up(params["w2"].shape[1], LANE)
    P3 = _round_up(params["w3"].shape[1], LANE)
    P4 = _round_up(params["w4"].shape[1], LANE)

    def pad_w(w, rows, cols):
        out = jnp.zeros((rows, cols), compute_dtype)
        return out.at[: w.shape[0], : w.shape[1]].set(w.astype(compute_dtype))

    def pad_b(b, cols):
        out = jnp.zeros((1, cols), jnp.float32)
        return out.at[:, : b.shape[1]].set(b.astype(jnp.float32))

    w1 = pad_w(params["w1"], obs_dim, P1); b1 = pad_b(params["b1"], P1)
    w2 = pad_w(params["w2"], P1, P2);      b2 = pad_b(params["b2"], P2)
    w3 = pad_w(params["w3"], P2, P3);      b3 = pad_b(params["b3"], P3)
    w4 = pad_w(params["w4"], P3, P4);      b4 = pad_b(params["b4"], P4)

    # --- Batch tiling: sublane-aligned, large enough to amortize step cost. --
    TB = min(tb_max, _round_up(B, 8))
    B_pad = _round_up(B, TB)
    x = state
    if B_pad != B:
        x = jnp.zeros((B_pad, obs_dim), state.dtype).at[:B].set(state)

    grid = (B_pad // TB,)

    def const_spec(shape):
        # Constant block index across the batch grid -> stays VMEM-resident.
        return pl.BlockSpec(shape, lambda i: (0, 0))

    in_specs = [
        pl.BlockSpec((TB, obs_dim), lambda i: (i, 0)),   # streamed activations
        const_spec(w1.shape), const_spec(b1.shape),
        const_spec(w2.shape), const_spec(b2.shape),
        const_spec(w3.shape), const_spec(b3.shape),
        const_spec(w4.shape), const_spec(b4.shape),
    ]
    out_specs = pl.BlockSpec((TB, P4), lambda i: (i, 0))

    flops = 2 * B_pad * (obs_dim * P1 + P1 * P2 + P2 * P3 + P3 * P4)
    bytes_accessed = (
        x.size * x.dtype.itemsize
        + sum(a.size * a.dtype.itemsize for a in (w1, b1, w2, b2, w3, b3, w4, b4))
        + B_pad * P4 * 4
    )

    out = pl.pallas_call(
        qnetwork_kernel,
        out_shape=jax.ShapeDtypeStruct((B_pad, P4), jnp.float32),
        grid=grid,
        in_specs=in_specs,
        out_specs=out_specs,
        compiler_params=pltpu.CompilerParams(
            dimension_semantics=("parallel",),  # megacore split on v7x
        ),
        cost_estimate=pl.CostEstimate(
            flops=flops, transcendentals=0, bytes_accessed=bytes_accessed
        ),
    )(x, w1, b1, w2, b2, w3, b3, w4, b4)

    return out[:B, :action_dim]


def init_params(key, observation_dim, fc1_dim, fc2_dim, action_dim):
    """Deterministic synthetic init (Kaiming-uniform-ish, like torch Linear default)."""
    dims = [(observation_dim, fc1_dim),
            (fc1_dim, fc1_dim),
            (fc1_dim, fc2_dim),
            (fc2_dim, action_dim)]
    params = {}
    for i, (fan_in, fan_out) in enumerate(dims, start=1):
        key, kw, kb = jax.random.split(key, 3)
        bound = 1.0 / jnp.sqrt(jnp.float32(fan_in))
        params[f"w{i}"] = jax.random.uniform(
            kw, (fan_in, fan_out), jnp.float32, -bound, bound)
        # Bias kept 2D (1, out) so it broadcasts cleanly over the batch in-kernel.
        params[f"b{i}"] = jax.random.uniform(
            kb, (1, fan_out), jnp.float32, -bound, bound)
    return params


def reference_forward(state, params):
    h = state
    for i in range(1, 5):
        h = jnp.maximum(h @ params[f"w{i}"] + params[f"b{i}"], 0.0)
    return h


# TODO(synk): Adam optimizer / MSELoss from QNetwork.__init__ are training-time
# constructs with no forward-pass Pallas equivalent; only forward() is implemented.

if __name__ == "__main__":
    # Small config consistent with QNetwork's __init__.
    cfg = dict(observation_dim=16, FC1=64, FC2=32, action_dim=8)
    batch = 8

    key = jax.random.PRNGKey(0)
    key, kx = jax.random.split(key)
    state = jax.random.normal(kx, (batch, cfg["observation_dim"]), jnp.float32)

    params = init_params(key, cfg["observation_dim"], cfg["FC1"],
                         cfg["FC2"], cfg["action_dim"])

    ref = reference_forward(state, params)

    # Exact f32 compute path (tight tolerance).
    out_f32 = jax.block_until_ready(
        qnetwork_forward(state, params, compute_dtype=jnp.float32))
    assert out_f32.shape == (batch, cfg["action_dim"])
    assert jnp.allclose(out_f32, ref, atol=1e-5, rtol=1e-5), "f32 mismatch vs reference"

    # Default bf16-MXU path (f32 accumulate) — loose tolerance for bf16 inputs.
    out_bf16 = jax.block_until_ready(qnetwork_forward(state, params))
    assert out_bf16.shape == (batch, cfg["action_dim"])
    assert jnp.allclose(out_bf16, ref, atol=5e-2, rtol=5e-2), "bf16 mismatch vs reference"

    print("KERNEL_OK")
</pallas_src>

<mosaic_0001>
module attributes {stable_mosaic.version = 11 : i64} {
  func.func @qnetwork_kernel(%arg0: i32, %arg1: memref<8x16xf32, #tpu.memory_space<vmem>>, %arg2: memref<16x128xf32, #tpu.memory_space<vmem>>, %arg3: memref<1x128xf32, #tpu.memory_space<vmem>>, %arg4: memref<128x128xf32, #tpu.memory_space<vmem>>, %arg5: memref<1x128xf32, #tpu.memory_space<vmem>>, %arg6: memref<128x128xf32, #tpu.memory_space<vmem>>, %arg7: memref<1x128xf32, #tpu.memory_space<vmem>>, %arg8: memref<128x128xf32, #tpu.memory_space<vmem>>, %arg9: memref<1x128xf32, #tpu.memory_space<vmem>>, %arg10: memref<8x128xf32, #tpu.memory_space<vmem>>) attributes {dimension_semantics = [#tpu.dimension_semantics<parallel>], iteration_bounds = array<i64: 1>, scalar_prefetch = 0 : i64, scratch_operands = 0 : i64, tpu.core_type = #tpu.core_type<tc>, window_params = [{transform_indices = @transform_0, window_bounds = array<i64: 8, 16>}, {pipeline_mode = #tpu.pipeline_mode<synchronous>, transform_indices = @transform_1, window_bounds = array<i64: 16, 128>}, {pipeline_mode = #tpu.pipeline_mode<synchronous>, transform_indices = @transform_2, window_bounds = array<i64: 1, 128>}, {pipeline_mode = #tpu.pipeline_mode<synchronous>, transform_indices = @transform_3, window_bounds = array<i64: 128, 128>}, {pipeline_mode = #tpu.pipeline_mode<synchronous>, transform_indices = @transform_4, window_bounds = array<i64: 1, 128>}, {pipeline_mode = #tpu.pipeline_mode<synchronous>, transform_indices = @transform_5, window_bounds = array<i64: 128, 128>}, {pipeline_mode = #tpu.pipeline_mode<synchronous>, transform_indices = @transform_6, window_bounds = array<i64: 1, 128>}, {pipeline_mode = #tpu.pipeline_mode<synchronous>, transform_indices = @transform_7, window_bounds = array<i64: 128, 128>}, {pipeline_mode = #tpu.pipeline_mode<synchronous>, transform_indices = @transform_8, window_bounds = array<i64: 1, 128>}, {transform_indices = @transform_9, window_bounds = array<i64: 8, 128>}]} {
    %c0 = arith.constant 0 : index
    %c0_0 = arith.constant 0 : index
    %0 = vector.load %arg1[%c0, %c0_0] : memref<8x16xf32, #tpu.memory_space<vmem>>, vector<8x16xf32>
    %c0_1 = arith.constant 0 : index
    %c0_2 = arith.constant 0 : index
    %1 = vector.load %arg2[%c0_1, %c0_2] : memref<16x128xf32, #tpu.memory_space<vmem>>, vector<16x128xf32>
    %cst = arith.constant dense<0.000000e+00> : vector<8x128xf32>
    %2 = tpu.matmul %0, %1, %cst {dimension_numbers = #tpu.dot_dimension_numbers<[1], [0], [0], [1], [0, 0, 1, 1], [], []>} : vector<8x16xf32>, vector<16x128xf32>, vector<8x128xf32> -> vector<8x128xf32>
    %c0_3 = arith.constant 0 : index
    %c0_4 = arith.constant 0 : index
    %3 = vector.load %arg3[%c0_3, %c0_4] : memref<1x128xf32, #tpu.memory_space<vmem>>, vector<1x128xf32>
    %4 = vector.broadcast %3 : vector<1x128xf32> to vector<8x128xf32>
    %5 = arith.addf %2, %4 : vector<8x128xf32>
    %cst_5 = arith.constant 0.000000e+00 : f32
    %6 = vector.broadcast %cst_5 : f32 to vector<8x128xf32>
    %7 = arith.maximumf %5, %6 : vector<8x128xf32>
    %c0_6 = arith.constant 0 : index
    %c0_7 = arith.constant 0 : index
    %8 = vector.load %arg4[%c0_6, %c0_7] : memref<128x128xf32, #tpu.memory_space<vmem>>, vector<128x128xf32>
    %cst_8 = arith.constant dense<0.000000e+00> : vector<8x128xf32>
    %9 = tpu.matmul %7, %8, %cst_8 {dimension_numbers = #tpu.dot_dimension_numbers<[1], [0], [0], [1], [0, 0, 1, 1], [], []>} : vector<8x128xf32>, vector<128x128xf32>, vector<8x128xf32> -> vector<8x128xf32>
    %c0_9 = arith.constant 0 : index
    %c0_10 = arith.constant 0 : index
    %10 = vector.load %arg5[%c0_9, %c0_10] : memref<1x128xf32, #tpu.memory_space<vmem>>, vector<1x128xf32>
    %11 = vector.broadcast %10 : vector<1x128xf32> to vector<8x128xf32>
    %12 = arith.addf %9, %11 : vector<8x128xf32>
    %cst_11 = arith.constant 0.000000e+00 : f32
    %13 = vector.broadcast %cst_11 : f32 to vector<8x128xf32>
    %14 = arith.maximumf %12, %13 : vector<8x128xf32>
    %c0_12 = arith.constant 0 : index
    %c0_13 = arith.constant 0 : index
    %15 = vector.load %arg6[%c0_12, %c0_13] : memref<128x128xf32, #tpu.memory_space<vmem>>, vector<128x128xf32>
    %cst_14 = arith.constant dense<0.000000e+00> : vector<8x128xf32>
    %16 = tpu.matmul %14, %15, %cst_14 {dimension_numbers = #tpu.dot_dimension_numbers<[1], [0], [0], [1], [0, 0, 1, 1], [], []>} : vector<8x128xf32>, vector<128x128xf32>, vector<8x128xf32> -> vector<8x128xf32>
    %c0_15 = arith.constant 0 : index
    %c0_16 = arith.constant 0 : index
    %17 = vector.load %arg7[%c0_15, %c0_16] : memref<1x128xf32, #tpu.memory_space<vmem>>, vector<1x128xf32>
    %18 = vector.broadcast %17 : vector<1x128xf32> to vector<8x128xf32>
    %19 = arith.addf %16, %18 : vector<8x128xf32>
    %cst_17 = arith.constant 0.000000e+00 : f32
    %20 = vector.broadcast %cst_17 : f32 to vector<8x128xf32>
    %21 = arith.maximumf %19, %20 : vector<8x128xf32>
    %c0_18 = arith.constant 0 : index
    %c0_19 = arith.constant 0 : index
    %22 = vector.load %arg8[%c0_18, %c0_19] : memref<128x128xf32, #tpu.memory_space<vmem>>, vector<128x128xf32>
    %cst_20 = arith.constant dense<0.000000e+00> : vector<8x128xf32>
    %23 = tpu.matmul %21, %22, %cst_20 {dimension_numbers = #tpu.dot_dimension_numbers<[1], [0], [0], [1], [0, 0, 1, 1], [], []>} : vector<8x128xf32>, vector<128x128xf32>, vector<8x128xf32> -> vector<8x128xf32>
    %c0_21 = arith.constant 0 : index
    %c0_22 = arith.constant 0 : index
    %24 = vector.load %arg9[%c0_21, %c0_22] : memref<1x128xf32, #tpu.memory_space<vmem>>, vector<1x128xf32>
    %25 = vector.broadcast %24 : vector<1x128xf32> to vector<8x128xf32>
    %26 = arith.addf %23, %25 : vector<8x128xf32>
    %cst_23 = arith.constant 0.000000e+00 : f32
    %27 = vector.broadcast %cst_23 : f32 to vector<8x128xf32>
    %28 = arith.maximumf %26, %27 : vector<8x128xf32>
    %c0_24 = arith.constant 0 : index
    %c0_25 = arith.constant 0 : index
    %29 = vector.load %arg10[%c0_24, %c0_25] : memref<8x128xf32, #tpu.memory_space<vmem>>, vector<8x128xf32>
    tpu.vector_store %arg10[%c0_24, %c0_25], %28 {strides = array<i32>} : memref<8x128xf32, #tpu.memory_space<vmem>>, vector<8x128xf32>,
    return
  }
  func.func @transform_0(%arg0: i32) -> (i32, i32) {
    %c0_i32 = arith.constant 0 : i32
    %c0_i32_0 = arith.constant 0 : i32
    return %arg0, %c0_i32 : i32, i32
  }
  func.func @transform_1(%arg0: i32) -> (i32, i32) {
    %c0_i32 = arith.constant 0 : i32
    %c0_i32_0 = arith.constant 0 : i32
    %c0_i32_1 = arith.constant 0 : i32
    return %c0_i32, %c0_i32_0 : i32, i32
  }
  func.func @transform_2(%arg0: i32) -> (i32, i32) {
    %c0_i32 = arith.constant 0 : i32
    %c0_i32_0 = arith.constant 0 : i32
    %c0_i32_1 = arith.constant 0 : i32
    return %c0_i32, %c0_i32_0 : i32, i32
  }
  func.func @transform_3(%arg0: i32) -> (i32, i32) {
    %c0_i32 = arith.constant 0 : i32
    %c0_i32_0 = arith.constant 0 : i32
    %c0_i32_1 = arith.constant 0 : i32
    return %c0_i32, %c0_i32_0 : i32, i32
  }
  func.func @transform_4(%arg0: i32) -> (i32, i32) {
    %c0_i32 = arith.constant 0 : i32
    %c0_i32_0 = arith.constant 0 : i32
    %c0_i32_1 = arith.constant 0 : i32
    return %c0_i32, %c0_i32_0 : i32, i32
  }
  func.func @transform_5(%arg0: i32) -> (i32, i32) {
    %c0_i32 = arith.constant 0 : i32
    %c0_i32_0 = arith.constant 0 : i32
    %c0_i32_1 = arith.constant 0 : i32
    return %c0_i32, %c0_i32_0 : i32, i32
  }
  func.func @transform_6(%arg0: i32) -> (i32, i32) {
    %c0_i32 = arith.constant 0 : i32
    %c0_i32_0 = arith.constant 0 : i32
    %c0_i32_1 = arith.constant 0 : i32
    return %c0_i32, %c0_i32_0 : i32, i32
  }
  func.func @transform_7(%arg0: i32) -> (i32, i32) {
    %c0_i32 = arith.constant 0 : i32
    %c0_i32_0 = arith.constant 0 : i32
    %c0_i32_1 = arith.constant 0 : i32
    return %c0_i32, %c0_i32_0 : i32, i32
  }
  func.func @transform_8(%arg0: i32) -> (i32, i32) {
    %c0_i32 = arith.constant 0 : i32
    %c0_i32_0 = arith.constant 0 : i32
    %c0_i32_1 = arith.constant 0 : i32
    return %c0_i32, %c0_i32_0 : i32, i32
  }
  func.func @transform_9(%arg0: i32) -> (i32, i32) {
    %c0_i32 = arith.constant 0 : i32
    %c0_i32_0 = arith.constant 0 : i32
    return %arg0, %c0_i32 : i32, i32
  }
}

</mosaic_0001>

<llo_original>
// kernel: qnetwork_forward.1
$region0: #{qnetwork_forward.1}
  #allocation0 [shape = 'u32[]', space=smem, size = 0x4, offset = 0x4, fixed_abs, tag = 'smem constant byte address 0x4 - core index']
  #allocation1 [shape = 'u32[72,128]{1,0:T(1,128)}', space=vmem, size = 0x9000, scoped, tag = 'internal scratch']
  %s0 = inlined_call_operand.vmem [shape: f32[8,16], index: 0, kind: input, shape index: {}]
  %s1 = inlined_call_operand.vmem [shape: f32[16,128], index: 1, kind: input, shape index: {}]
  %s2 = inlined_call_operand.vmem [shape: f32[1,128], index: 2, kind: input, shape index: {}]
  %s3 = inlined_call_operand.vmem [shape: f32[128,128], index: 3, kind: input, shape index: {}]
  %s4 = inlined_call_operand.vmem [shape: f32[1,128], index: 4, kind: input, shape index: {}]
  %s5 = inlined_call_operand.vmem [shape: f32[128,128], index: 5, kind: input, shape index: {}]
  %s6 = inlined_call_operand.vmem [shape: f32[1,128], index: 6, kind: input, shape index: {}]
  %s7 = inlined_call_operand.vmem [shape: f32[128,128], index: 7, kind: input, shape index: {}]
  %s8 = inlined_call_operand.vmem [shape: f32[1,128], index: 8, kind: input, shape index: {}]
  %s9 = inlined_call_operand.hbm [shape: f32[8,128], index: 9, kind: output, shape index: {}]
  %s10 = sld [smem:[#allocation0]]
  $region46: #{qnetwork_forward.1} parent=0
    _
  %s12 = ssub.s32 1, %s10
  %s13 = scalar_select 0, %s12, %s10
  $region1: #{qnetwork_forward.1} parent=0
    #allocation2 [shape = 'u8[4096]{0}', space=vmem, size = 0x1000, scoped, tag = 'output window, operand 0, single buffered']
    #allocation3 [shape = 's32[1]{0}', space=sflag, size = 0x4, scoped, tag = 'scoped memory for qnetwork_forward.1']
    %14 = vsyncpa [#allocation3], 0
    // Predicated region
    $region2: #{qnetwork_forward.1} parent=1 // pred_check
      _
    $region3: #{qnetwork_forward.1} parent=1 // pred_check_branch
      %16 = sbr.rel (0) target = $region5
    $region4: #{qnetwork_forward.1} parent=1 // pred_region
      _
    $region5: #{qnetwork_forward.1} parent=1 // pred_fallthru
      _
    // Predicated region
    $region6: #{qnetwork_forward.1} parent=1 // pred_check
      _
    $region7: #{qnetwork_forward.1} parent=1 // pred_check_branch
      %18 = sbr.rel (0) target = $region9
    $region8: #{qnetwork_forward.1} parent=1 // pred_region
      _
    $region9: #{qnetwork_forward.1} parent=1 // pred_fallthru
      _
    // Predicated region
    $region10: #{qnetwork_forward.1} parent=1 // pred_check
      _
    $region11: #{qnetwork_forward.1} parent=1 // pred_check_branch
      %20 = sbr.rel (0) target = $region13
    $region12: #{qnetwork_forward.1} parent=1 // pred_region
      _
    $region13: #{qnetwork_forward.1} parent=1 // pred_fallthru
      _
    // Predicated region
    $region14: #{qnetwork_forward.1} parent=1 // pred_check
      _
    $region15: #{qnetwork_forward.1} parent=1 // pred_check_branch
      %22 = sbr.rel (0) target = $region17
    $region16: #{qnetwork_forward.1} parent=1 // pred_region
      _
    $region17: #{qnetwork_forward.1} parent=1 // pred_fallthru
      _
    // Predicated region
    $region18: #{qnetwork_forward.1} parent=1 // pred_check
      _
    $region19: #{qnetwork_forward.1} parent=1 // pred_check_branch
      %24 = sbr.rel (0) target = $region21
    $region20: #{qnetwork_forward.1} parent=1 // pred_region
      _
    $region21: #{qnetwork_forward.1} parent=1 // pred_fallthru
      _
    // Predicated region
    $region22: #{qnetwork_forward.1} parent=1 // pred_check
      _
    $region23: #{qnetwork_forward.1} parent=1 // pred_check_branch
      %26 = sbr.rel (0) target = $region25
    $region24: #{qnetwork_forward.1} parent=1 // pred_region
      _
    $region25: #{qnetwork_forward.1} parent=1 // pred_fallthru
      _
    // Predicated region
    $region26: #{qnetwork_forward.1} parent=1 // pred_check
      _
    $region27: #{qnetwork_forward.1} parent=1 // pred_check_branch
      %28 = sbr.rel (0) target = $region29
    $region28: #{qnetwork_forward.1} parent=1 // pred_region
      _
    $region29: #{qnetwork_forward.1} parent=1 // pred_fallthru
      _
    // Predicated region
    $region30: #{qnetwork_forward.1} parent=1 // pred_check
      _
    $region31: #{qnetwork_forward.1} parent=1 // pred_check_branch
      %30 = sbr.rel (0) target = $region33
    $region32: #{qnetwork_forward.1} parent=1 // pred_region
      _
    $region33: #{qnetwork_forward.1} parent=1 // pred_fallthru
      _
    // Predicated region
    $region34: #{qnetwork_forward.1} parent=1 // pred_check
      _
    $region35: #{qnetwork_forward.1} parent=1 // pred_check_branch
      %32 = sbr.rel (0) target = $region37
    $region36: #{qnetwork_forward.1} parent=1 // pred_region
      _
    $region37: #{qnetwork_forward.1} parent=1 // pred_fallthru
      _
    %v33 = vld [vmem:[%s0] sm:$0xff]
    %v34 = vld [vmem:[%s1] sm:$0xff]
    %v35 = vld [vmem:[%s1 + $0x8] sm:$0xff]
    %v36 = vld [vmem:[%s2] sm:$0x1]
    %v38 = vperm.slane %v36, 0
    %vm40 = vcmask 130048
    %v42 = vsel %vm40, %v33, 0
    %44 = vmatpush.msra.mxu0 0.0
    %45 = vmatpush.msra.mxu0 0.0
    %46 = vmatpush.msra.mxu0 0.0
    %47 = vmatpush.msra.mxu0 0.0
    %48 = vmatpush.msra.mxu0 0.0
    %49 = vmatpush.msra.mxu0 0.0
    %50 = vmatpush.msra.mxu0 0.0
    %51 = vmatpush.msra.mxu0 0.0
    %52 = vmatpush.msra.mxu0 0.0
    %53 = vmatpush.msra.mxu0 0.0
    %54 = vmatpush.msra.mxu0 0.0
    %55 = vmatpush.msra.mxu0 0.0
    %56 = vmatpush.msra.mxu0 0.0
    %57 = vmatpush.msra.mxu0 0.0
    %58 = vmatpush.msra.mxu0 %v35
    %59 = vmatpush.msra.mxu0 %v34
    %60 = vmatmul.f32.gmra.mxu0 %v42
    %v61 = vpop.f32.mrf.mxu0
    %v62 = vadd.f32 %v38, %v61
    %63 = vdwg.mxu0
    %v64 = vmax.f32 %v62, 0.0
    %v65 = vld [vmem:[%s3] sm:$0xff]
    %v66 = vld [vmem:[%s3 + $0x8] sm:$0xff]
    %v67 = vld [vmem:[%s3 + $0x10] sm:$0xff]
    %v68 = vld [vmem:[%s3 + $0x18] sm:$0xff]
    %v69 = vld [vmem:[%s3 + $0x20] sm:$0xff]
    %v70 = vld [vmem:[%s3 + $0x28] sm:$0xff]
    %v71 = vld [vmem:[%s3 + $0x30] sm:$0xff]
    %v72 = vld [vmem:[%s3 + $0x38] sm:$0xff]
    %v73 = vld [vmem:[%s3 + $0x40] sm:$0xff]
    %v74 = vld [vmem:[%s3 + $0x48] sm:$0xff]
    %v75 = vld [vmem:[%s3 + $0x50] sm:$0xff]
    %v76 = vld [vmem:[%s3 + $0x58] sm:$0xff]
    %v77 = vld [vmem:[%s3 + $0x60] sm:$0xff]
    %v78 = vld [vmem:[%s3 + $0x68] sm:$0xff]
    %v79 = vld [vmem:[%s3 + $0x70] sm:$0xff]
    %v80 = vld [vmem:[%s3 + $0x78] sm:$0xff]
    %v81 = vld [vmem:[%s4] sm:$0x1]
    %v83 = vperm.slane %v81, 0
    %85 = vmatpush.msra.mxu0 %v80
    %86 = vmatpush.msra.mxu0 %v79
    %87 = vmatpush.msra.mxu0 %v78
    %88 = vmatpush.msra.mxu0 %v77
    %89 = vmatpush.msra.mxu0 %v76
    %90 = vmatpush.msra.mxu0 %v75
    %91 = vmatpush.msra.mxu0 %v74
    %92 = vmatpush.msra.mxu0 %v73
    %93 = vmatpush.msra.mxu0 %v72
    %94 = vmatpush.msra.mxu0 %v71
    %95 = vmatpush.msra.mxu0 %v70
    %96 = vmatpush.msra.mxu0 %v69
    %97 = vmatpush.msra.mxu0 %v68
    %98 = vmatpush.msra.mxu0 %v67
    %99 = vmatpush.msra.mxu0 %v66
    %100 = vmatpush.msra.mxu0 %v65
    %101 = vmatmul.f32.gmra.mxu0 %v64
    %v102 = vpop.f32.mrf.mxu0
    %v103 = vadd.f32 %v83, %v102
    %104 = vdwg.mxu0
    %v105 = vmax.f32 %v103, 0.0
    %v106 = vld [vmem:[%s5] sm:$0xff]
    %v107 = vld [vmem:[%s5 + $0x8] sm:$0xff]
    %v108 = vld [vmem:[%s5 + $0x10] sm:$0xff]
    %v109 = vld [vmem:[%s5 + $0x18] sm:$0xff]
    %v110 = vld [vmem:[%s5 + $0x20] sm:$0xff]
    %v111 = vld [vmem:[%s5 + $0x28] sm:$0xff]
    %v112 = vld [vmem:[%s5 + $0x30] sm:$0xff]
    %v113 = vld [vmem:[%s5 + $0x38] sm:$0xff]
    %v114 = vld [vmem:[%s5 + $0x40] sm:$0xff]
    %v115 = vld [vmem:[%s5 + $0x48] sm:$0xff]
    %v116 = vld [vmem:[%s5 + $0x50] sm:$0xff]
    %v117 = vld [vmem:[%s5 + $0x58] sm:$0xff]
    %v118 = vld [vmem:[%s5 + $0x60] sm:$0xff]
    %v119 = vld [vmem:[%s5 + $0x68] sm:$0xff]
    %v120 = vld [vmem:[%s5 + $0x70] sm:$0xff]
    %v121 = vld [vmem:[%s5 + $0x78] sm:$0xff]
    %v122 = vld [vmem:[%s6] sm:$0x1]
    %v124 = vperm.slane %v122, 0
    %126 = vmatpush.msra.mxu0 %v121
    %127 = vmatpush.msra.mxu0 %v120
    %128 = vmatpush.msra.mxu0 %v119
    %129 = vmatpush.msra.mxu0 %v118
    %130 = vmatpush.msra.mxu0 %v117
    %131 = vmatpush.msra.mxu0 %v116
    %132 = vmatpush.msra.mxu0 %v115
    %133 = vmatpush.msra.mxu0 %v114
    %134 = vmatpush.msra.mxu0 %v113
    %135 = vmatpush.msra.mxu0 %v112
    %136 = vmatpush.msra.mxu0 %v111
    %137 = vmatpush.msra.mxu0 %v110
    %138 = vmatpush.msra.mxu0 %v109
    %139 = vmatpush.msra.mxu0 %v108
    %140 = vmatpush.msra.mxu0 %v107
    %141 = vmatpush.msra.mxu0 %v106
    %142 = vmatmul.f32.gmra.mxu0 %v105
    %v143 = vpop.f32.mrf.mxu0
    %v144 = vadd.f32 %v124, %v143
    %145 = vdwg.mxu0
    %v146 = vmax.f32 %v144, 0.0
    %v147 = vld [vmem:[%s7] sm:$0xff]
    %v148 = vld [vmem:[%s7 + $0x8] sm:$0xff]
    %v149 = vld [vmem:[%s7 + $0x10] sm:$0xff]
    %v150 = vld [vmem:[%s7 + $0x18] sm:$0xff]
    %v151 = vld [vmem:[%s7 + $0x20] sm:$0xff]
    %v152 = vld [vmem:[%s7 + $0x28] sm:$0xff]
    %v153 = vld [vmem:[%s7 + $0x30] sm:$0xff]
    %v154 = vld [vmem:[%s7 + $0x38] sm:$0xff]
    %v155 = vld [vmem:[%s7 + $0x40] sm:$0xff]
    %v156 = vld [vmem:[%s7 + $0x48] sm:$0xff]
    %v157 = vld [vmem:[%s7 + $0x50] sm:$0xff]
    %v158 = vld [vmem:[%s7 + $0x58] sm:$0xff]
    %v159 = vld [vmem:[%s7 + $0x60] sm:$0xff]
    %v160 = vld [vmem:[%s7 + $0x68] sm:$0xff]
    %v161 = vld [vmem:[%s7 + $0x70] sm:$0xff]
    %v162 = vld [vmem:[%s7 + $0x78] sm:$0xff]
    %v163 = vld [vmem:[%s8] sm:$0x1]
    %v165 = vperm.slane %v163, 0
    %167 = vmatpush.msra.mxu0 %v162
    %168 = vmatpush.msra.mxu0 %v161
    %169 = vmatpush.msra.mxu0 %v160
    %170 = vmatpush.msra.mxu0 %v159
    %171 = vmatpush.msra.mxu0 %v158
    %172 = vmatpush.msra.mxu0 %v157
    %173 = vmatpush.msra.mxu0 %v156
    %174 = vmatpush.msra.mxu0 %v155
    %175 = vmatpush.msra.mxu0 %v154
    %176 = vmatpush.msra.mxu0 %v153
    %177 = vmatpush.msra.mxu0 %v152
    %178 = vmatpush.msra.mxu0 %v151
    %179 = vmatpush.msra.mxu0 %v150
    %180 = vmatpush.msra.mxu0 %v149
    %181 = vmatpush.msra.mxu0 %v148
    %182 = vmatpush.msra.mxu0 %v147
    %183 = vmatmul.f32.gmra.mxu0 %v146
    %v184 = vpop.f32.mrf.mxu0
    %v185 = vadd.f32 %v165, %v184
    %186 = vdwg.mxu0
    %v187 = vmax.f32 %v185, 0.0
    %188 = vst [vmem:[#allocation2] sm:$0xff] %v187
    // Predicated region
    $region38: #{qnetwork_forward.1} parent=1 // pred_check
      _
    $region39: #{qnetwork_forward.1} parent=1 // pred_check_branch
      %190 = sbr.rel (0) target = $region41
    $region40: #{qnetwork_forward.1} parent=1 // pred_region
      %192 = vsyncadd [#allocation3], 0
      %s194 = sshll.u32 [#allocation2], 4
      %s195 = int_to_ptr.vmem [resolvable:$true] %s194
      %s196 = sshll.u32 %s9, 4
      %s197 = int_to_ptr.hbm [resolvable:$true] %s196
      %199 = dma.vmem_to_hbm [thread:$0]  %s195, 128, %s197, [#allocation3]
    $region41: #{qnetwork_forward.1} parent=1 // pred_fallthru
      _
    // Predicated region
    $region42: #{qnetwork_forward.1} parent=1 // pred_check
      _
    $region43: #{qnetwork_forward.1} parent=1 // pred_check_branch
      %201 = sbr.rel (0) target = $region45
    $region44: #{qnetwork_forward.1} parent=1 // pred_region
      %203 = dma.done [#allocation3], 128
    $region45: #{qnetwork_forward.1} parent=1 // pred_fallthru
      _
    %204 = vsyncpa [#allocation3], 1

</llo_original>
